<compile_context>
chip_gen: v7x
topology: tpu7x:2x2x1
jax: 0.10.0
libtpu: 0.0.40
codegen_flags: <defaults>
</compile_context>

<pallas_src>
import jax
import jax.numpy as jnp
from jax.experimental import pallas as pl
from jax.experimental.pallas import tpu as pltpu

_SMALL_BATCH_MAX = 1024   # gridless path only for genuinely small batches
_LANES = 128              # vreg lane width / lane-tile multiple for blocks


# ---------------------------------------------------------------------------
# Small-batch kernel: gridless (no pipeline prologue/epilogue), whole arrays
# as single VMEM blocks, VPU broadcast-multiply + lane reduce, single store.
# ---------------------------------------------------------------------------
def _linear_small_kernel(x_ref, w_ref, b_ref, o_ref):
    # x_ref: [B, IN], w_ref: [OUT, IN] (PyTorch layout), b_ref: [1, OUT],
    # o_ref: [B, OUT].  OUT is tiny and static -> loop unrolls at trace time.
    x = x_ref[...]
    w = w_ref[...]
    cols = []
    for o in range(o_ref.shape[1]):
        # [1, IN] weight row broadcast against [B, IN], lane reduction.
        cols.append(jnp.sum(x * w[o:o + 1, :], axis=-1, keepdims=True))  # [B,1]
    # Single full-tile store; bias add hoisted out of the per-column loop.
    o_ref[...] = (jnp.concatenate(cols, axis=-1) + b_ref[...]).astype(o_ref.dtype)


def _forward_small(x, w, b):
    B, _ = x.shape
    OUT = w.shape[0]
    vmem = pl.BlockSpec(memory_space=pltpu.MemorySpace.VMEM)
    return pl.pallas_call(
        _linear_small_kernel,
        out_shape=jax.ShapeDtypeStruct((B, OUT), x.dtype),
        in_specs=[vmem, vmem, vmem],   # whole arrays, single VMEM blocks
        out_specs=vmem,                # no grid -> no pipeline overhead
    )(x, w, b.reshape(1, OUT))


# ---------------------------------------------------------------------------
# Batch-tiled kernel (large B).  Pure bandwidth problem, so:
#   * x streams in [tile_m, IN] blocks (the only sizable per-step DMA),
#   * w / b live in SMEM as scalars (no padded VMEM blocks, no per-step DMA),
#   * output is written lane-dense as [OUT, tile_m] (batch on lanes),
#   * compute is VPU-only: one XLU transpose of the x tile, then IN*OUT
#     scalar-broadcast FMAs -> exact f32, no MXU-padding waste.
# ---------------------------------------------------------------------------
def _linear_tiled_kernel(x_ref, w_ref, b_ref, o_ref):
    # x_ref: [TM, IN] VMEM, w_ref: [OUT, IN] SMEM, b_ref: [OUT] SMEM,
    # o_ref: [OUT, TM] VMEM (lane-dense output: batch on the 128-lane axis).
    in_dim = x_ref.shape[1]
    out_dim = o_ref.shape[0]
    # One sublane->lane transpose so the batch sits on lanes; everything
    # after this (FMAs and the store) is lane-dense.
    xt = jnp.transpose(x_ref[...])                      # [IN, TM]
    rows = []
    for o in range(out_dim):                            # OUT = 2: unrolled
        acc = xt[0:1, :] * w_ref[o, 0] + b_ref[o]       # [1, TM]
        for k in range(1, in_dim):                      # IN = 10: unrolled
            acc = acc + xt[k:k + 1, :] * w_ref[o, k]
        rows.append(acc)
    # Single unmasked, lane-dense store of the whole [OUT, TM] tile.
    o_ref[...] = jnp.concatenate(rows, axis=0).astype(o_ref.dtype)


def _round_up(n, m):
    return ((n + m - 1) // m) * m


def _forward_tiled(x, w, b, tile_m):
    B, IN = x.shape
    OUT = w.shape[0]
    # Tile must be a multiple of 128 lanes; cap it at ceil(B/2) so the grid
    # always has >= 2 steps and dimension_semantics=("parallel",) can split
    # the batch across v7x's two TensorCores (no-op on v5e/v6e).
    tile_m = max(_LANES, min(_round_up(tile_m, _LANES),
                             _round_up(pl.cdiv(B, 2), _LANES)))
    grid = (pl.cdiv(B, tile_m),)
    # NOTE: if B % tile_m != 0 the last x block contains out-of-range rows
    # with unspecified contents; they only feed output columns that are never
    # written back (there is no cross-row reduction), so this is benign.
    y_t = pl.pallas_call(
        _linear_tiled_kernel,
        out_shape=jax.ShapeDtypeStruct((OUT, B), x.dtype),  # lane-dense [OUT, B]
        grid=grid,
        in_specs=[
            pl.BlockSpec((tile_m, IN), lambda i: (i, 0)),        # x streams over batch
            pl.BlockSpec(memory_space=pltpu.MemorySpace.SMEM),   # w: 20 scalars
            pl.BlockSpec(memory_space=pltpu.MemorySpace.SMEM),   # b: 2 scalars
        ],
        out_specs=pl.BlockSpec((OUT, tile_m), lambda i: (0, i)),
        compiler_params=pltpu.CompilerParams(
            dimension_semantics=("parallel",),
            # Headroom over v5e's 16 MiB scoped-VMEM default; the only large
            # block is the double-buffered (lane-padded) x tile.
            vmem_limit_bytes=32 * 1024 * 1024,
        ),
    )(x, w, b)
    # Tiny consumer-side fixup back to the module's [B, OUT] semantics.
    return jnp.transpose(y_t)


def simple_model_forward(x, w, b, *, tile_m=4096):
    """y = x @ w.T + b   (PyTorch nn.Linear(10, 2) semantics).

    x: [B, IN] f32, w: [OUT, IN] f32 (PyTorch layout), b: [OUT] f32.
    B <= 1024 -> single gridless VPU kernel; larger B -> batch-tiled,
    lane-dense-output VPU kernel with tile_m rows per grid step.
    """
    if x.shape[0] <= _SMALL_BATCH_MAX:
        return _forward_small(x, w, b)
    return _forward_tiled(x, w, b, tile_m)


if __name__ == "__main__":
    key = jax.random.PRNGKey(0)
    kxs, kxl, kw, kb = jax.random.split(key, 4)

    IN, OUT = 10, 2
    bound = 1.0 / (IN ** 0.5)  # nn.Linear default init range
    w = jax.random.uniform(kw, (OUT, IN), minval=-bound, maxval=bound,
                           dtype=jnp.float32)
    b = jax.random.uniform(kb, (OUT,), minval=-bound, maxval=bound,
                           dtype=jnp.float32)

    def ref_forward(x):
        # Exact-f32 elementwise reference (same math as the VPU kernels).
        return jnp.sum(x[:, None, :] * w[None, :, :], axis=-1) + b

    # ---- small-batch path (gridless VPU kernel) ----
    B_small = 8
    x_small = jax.random.normal(kxs, (B_small, IN), dtype=jnp.float32)
    y_small = simple_model_forward(x_small, w, b)
    jax.block_until_ready(y_small)
    assert y_small.shape == (B_small, OUT)
    assert jnp.allclose(y_small, ref_forward(x_small), atol=1e-5, rtol=1e-5)

    # ---- batch-tiled path (lane-dense [OUT, B] kernel, 4 grid steps) ----
    B_big = 2048
    x_big = jax.random.normal(kxl, (B_big, IN), dtype=jnp.float32)
    y_big = simple_model_forward(x_big, w, b, tile_m=512)
    jax.block_until_ready(y_big)
    assert y_big.shape == (B_big, OUT)
    # VPU contraction is exact f32 -> tight tolerance (no MXU bf16 passes).
    assert jnp.allclose(y_big, ref_forward(x_big), atol=1e-5, rtol=1e-5)

    print("KERNEL_OK")
</pallas_src>

<mosaic_0001>
module attributes {stable_mosaic.version = 11 : i64} {
  func.func @_linear_small_kernel(%arg0: memref<8x10xf32, #tpu.memory_space<vmem>>, %arg1: memref<2x10xf32, #tpu.memory_space<vmem>>, %arg2: memref<1x2xf32, #tpu.memory_space<vmem>>, %arg3: memref<8x2xf32, #tpu.memory_space<vmem>>) attributes {dimension_semantics = [], scalar_prefetch = 0 : i64, scratch_operands = 0 : i64, tpu.core_type = #tpu.core_type<tc>} {
    %c0 = arith.constant 0 : index
    %c0_0 = arith.constant 0 : index
    %0 = vector.load %arg0[%c0, %c0_0] : memref<8x10xf32, #tpu.memory_space<vmem>>, vector<8x10xf32>
    %c0_1 = arith.constant 0 : index
    %c0_2 = arith.constant 0 : index
    %1 = vector.load %arg1[%c0_1, %c0_2] : memref<2x10xf32, #tpu.memory_space<vmem>>, vector<2x10xf32>
    %2 = vector.extract_strided_slice %1 {offsets = [0, 0], sizes = [1, 10], strides = [1, 1]} : vector<2x10xf32> to vector<1x10xf32>
    %3 = vector.broadcast %2 : vector<1x10xf32> to vector<8x10xf32>
    %4 = arith.mulf %0, %3 : vector<8x10xf32>
    %cst = arith.constant dense<0.000000e+00> : vector<8xf32>
    %5 = vector.multi_reduction <add>, %4, %cst [1] : vector<8x10xf32> to vector<8xf32>
    %6 = vector.shape_cast %5 : vector<8xf32> to vector<8x1xf32>
    %7 = vector.extract_strided_slice %1 {offsets = [1, 0], sizes = [1, 10], strides = [1, 1]} : vector<2x10xf32> to vector<1x10xf32>
    %8 = vector.broadcast %7 : vector<1x10xf32> to vector<8x10xf32>
    %9 = arith.mulf %0, %8 : vector<8x10xf32>
    %cst_3 = arith.constant dense<0.000000e+00> : vector<8xf32>
    %10 = vector.multi_reduction <add>, %9, %cst_3 [1] : vector<8x10xf32> to vector<8xf32>
    %11 = vector.shape_cast %10 : vector<8xf32> to vector<8x1xf32>
    %12 = tpu.concatenate %6, %11 in 1 : vector<8x1xf32>, vector<8x1xf32> -> vector<8x2xf32>
    %c0_4 = arith.constant 0 : index
    %c0_5 = arith.constant 0 : index
    %13 = vector.load %arg2[%c0_4, %c0_5] : memref<1x2xf32, #tpu.memory_space<vmem>>, vector<1x2xf32>
    %14 = vector.broadcast %13 : vector<1x2xf32> to vector<8x2xf32>
    %15 = arith.addf %12, %14 : vector<8x2xf32>
    %c0_6 = arith.constant 0 : index
    %c0_7 = arith.constant 0 : index
    %16 = vector.load %arg3[%c0_6, %c0_7] : memref<8x2xf32, #tpu.memory_space<vmem>>, vector<8x2xf32>
    tpu.vector_store %arg3[%c0_6, %c0_7], %15 {strides = array<i32>} : memref<8x2xf32, #tpu.memory_space<vmem>>, vector<8x2xf32>,
    return
  }
}

</mosaic_0001>

<llo_original>
// kernel: tpu_custom_call.1
$region0: #{tpu_custom_call.1}
  #allocation0 [shape = 'u32[]', space=smem, size = 0x4, offset = 0x4, fixed_abs, tag = 'smem constant byte address 0x4 - core index']
  #allocation1 [shape = 'u32[144,128]{1,0:T(1,128)}', space=vmem, size = 0x12000, scoped, tag = 'internal scratch']
  %s0 = inlined_call_operand.hbm [shape: f32[8,10], index: 0, kind: input, shape index: {}]
  %s1 = inlined_call_operand.vmem [shape: f32[2,10], index: 1, kind: input, shape index: {}]
  %s2 = inlined_call_operand.vmem [shape: f32[1,2], index: 2, kind: input, shape index: {}]
  %s3 = inlined_call_operand.vmem [shape: f32[8,2], index: 3, kind: output, shape index: {}]
  %s4 = sld [smem:[#allocation0]]
  $region26: #{tpu_custom_call.1} parent=0
    _
  %s6 = ssub.s32 1, %s4
  %s7 = scalar_select 0, %s6, %s4
  $region1: #{tpu_custom_call.1} parent=0
    #allocation2 [shape = 'u8[4096]{0}', space=vmem, size = 0x1000, scoped, tag = 'input window, operand 0, single buffered']
    #allocation3 [shape = 's32[1]{0}', space=sflag, size = 0x4, scoped, tag = 'scoped memory for tpu_custom_call.1']
    %8 = vsyncpa [#allocation3], 0
    // Predicated region
    $region2: #{tpu_custom_call.1} parent=1 // pred_check
      _
    $region3: #{tpu_custom_call.1} parent=1 // pred_check_branch
      %10 = sbr.rel (0) target = $region5
    $region4: #{tpu_custom_call.1} parent=1 // pred_region
      %s12 = ssub.s32 128, 128
      %13 = vsyncadd [#allocation3], %s12
      %s15 = sshll.u32 [#allocation2], 4
      %s16 = int_to_ptr.vmem [resolvable:$true] %s15
      %18 = dma.hbm_to_vmem [thread:$0]  %s0, 128, %s16, [#allocation3]
    $region5: #{tpu_custom_call.1} parent=1 // pred_fallthru
      _
    // Predicated region
    $region6: #{tpu_custom_call.1} parent=1 // pred_check
      _
    $region7: #{tpu_custom_call.1} parent=1 // pred_check_branch
      %20 = sbr.rel (0) target = $region9
    $region8: #{tpu_custom_call.1} parent=1 // pred_region
      _
    $region9: #{tpu_custom_call.1} parent=1 // pred_fallthru
      _
    // Predicated region
    $region10: #{tpu_custom_call.1} parent=1 // pred_check
      _
    $region11: #{tpu_custom_call.1} parent=1 // pred_check_branch
      %22 = sbr.rel (0) target = $region13
    $region12: #{tpu_custom_call.1} parent=1 // pred_region
      _
    $region13: #{tpu_custom_call.1} parent=1 // pred_fallthru
      _
    // Predicated region
    $region14: #{tpu_custom_call.1} parent=1 // pred_check
      _
    $region15: #{tpu_custom_call.1} parent=1 // pred_check_branch
      %24 = sbr.rel (0) target = $region17
    $region16: #{tpu_custom_call.1} parent=1 // pred_region
      %25 = dma.done [#allocation3], 128
    $region17: #{tpu_custom_call.1} parent=1 // pred_fallthru
      _
    %v26 = vld [vmem:[#allocation2] sm:$0xff]
    %v27 = vld [vmem:[%s1] sm:$0x3]
    %v28 = vlaneseq
    %v29 = vshrl.u32 %v28, 7
    %v30 = vsub.s32 0, %v29
    %v31 = vrot.slane %v27, %v30
    %v32 = vmul.f32 %v26, %v31
    %vm33 = vcmask 80896
    %v34 = vsel %vm33, %v32, 0.0
    %35 = vadd.xlane.f32.xlu0 %v34
    %v36 = vpop.xlane.xlu0 %35
    %v37 = vlaneseq
    %v38 = vshrl.u32 %v37, 7
    %v39 = vsub.s32 1, %v38
    %v40 = vrot.slane %v27, %v39
    %v41 = vmul.f32 %v26, %v40
    %v42 = vsel %vm33, %v41, 0.0
    %43 = vadd.xlane.f32.xlu0 %v42
    %v44 = vpop.xlane.xlu0 %43
    %vm45 = vcmask 7168
    %v46 = vsel %vm45, %v36, %v44
    %v47 = vld [vmem:[%s2] sm:$0x1]
    %v49 = vlaneseq
    %v50 = vshrl.u32 %v49, 7
    %v51 = vsub.s32 0, %v50
    %v52 = vrot.slane %v47, %v51
    %v54 = vadd.f32 %v46, %v52
    %vm55 = vcmask 15360
    %56 = vst.msk [vmem:[%s3] sm:$0xff] %vm55, %v54
    // Predicated region
    $region18: #{tpu_custom_call.1} parent=1 // pred_check
      _
    $region19: #{tpu_custom_call.1} parent=1 // pred_check_branch
      %58 = sbr.rel (0) target = $region21
    $region20: #{tpu_custom_call.1} parent=1 // pred_region
      _
    $region21: #{tpu_custom_call.1} parent=1 // pred_fallthru
      _
    // Predicated region
    $region22: #{tpu_custom_call.1} parent=1 // pred_check
      _
    $region23: #{tpu_custom_call.1} parent=1 // pred_check_branch
      %60 = sbr.rel (0) target = $region25
    $region24: #{tpu_custom_call.1} parent=1 // pred_region
      _
    $region25: #{tpu_custom_call.1} parent=1 // pred_fallthru
      _
    %61 = vsyncpa [#allocation3], 1

</llo_original>
